<compile_context>
chip_gen: v5e
topology: v5e:2x2
jax: 0.10.0
libtpu: 0.0.40
codegen_flags: <defaults>
</compile_context>

<pallas_src>
import numpy as np
import jax
import jax.numpy as jnp
from jax.experimental import pallas as pl
from jax.experimental.pallas import tpu as pltpu


def _make_freq_bands(n_freqs: int, log_space: bool) -> np.ndarray:
    if log_space:
        return 2.0 ** np.linspace(0.0, n_freqs - 1, n_freqs)
    return np.linspace(2.0 ** 0.0, 2.0 ** (n_freqs - 1), n_freqs)


def _round_up(x: int, m: int) -> int:
    return ((x + m - 1) // m) * m


def _pos_enc_kernel_factory(freq_bands: np.ndarray):
    """Elementwise sin/cos embedding kernel on channels-first (d_input, tile_n) blocks.

    Frequencies are baked in as trace-time constants.  The full (d_output, tile_n)
    tile is assembled in registers and written with ONE lane-dense store.
    """

    def kernel(x_ref, o_ref):
        x = x_ref[...].astype(jnp.float32)          # (d_input, tile_n), lanes = points
        parts = [x]                                  # identity block
        for f in freq_bands:                         # statically unrolled (n_freqs small)
            fx = jnp.float32(f) * x
            parts.append(jnp.sin(fx))
            parts.append(jnp.cos(fx))
        # single wide store: last dim (tile_n) is a multiple of 128 -> unmasked vst
        o_ref[...] = jnp.concatenate(parts, axis=0).astype(o_ref.dtype)

    return kernel


def positional_encoder(x: jax.Array, n_freqs: int, log_space: bool,
                       tile_n: int = 8192, out_dtype=None) -> jax.Array:
    """Pallas-backed equivalent of PositionalEncoder.forward.

    x: (..., 1, d_input)   (matches the reshape semantics of the PyTorch module)
    returns: (..., d_output) with d_output = d_input * (1 + 2*n_freqs)
    tile_n: points per grid step (rounded to a multiple of 128; sweep 2K-64K on real N).
    out_dtype: optional output dtype (e.g. jnp.bfloat16); compute stays f32.
    """
    assert x.shape[-2] == 1, (
        "PositionalEncoder expects (..., 1, d_input); the module's trailing reshape "
        "only works when the second-to-last dim is 1.")
    d_input = x.shape[-1]
    d_output = d_input * (1 + 2 * n_freqs)
    out_dtype = x.dtype if out_dtype is None else out_dtype
    freq_bands = _make_freq_bands(n_freqs, log_space)
    lead_shape = x.shape[:-2]

    # Flatten points, then present a lane-dense channels-first view to the kernel.
    x2d = x.reshape(-1, d_input)                     # (N, d_input)
    n = x2d.shape[0]
    xT = x2d.T                                       # (d_input, N): N on the lane axis

    # Tile sizing: multiple of 128 lanes, capped by (padded) N; pad N to a tile multiple.
    tile = max(128, min(_round_up(tile_n, 128), _round_up(n, 128)))
    n_pad = _round_up(n, tile)
    if n_pad != n:
        xT = jnp.pad(xT, ((0, 0), (0, n_pad - n)))   # zero-pad; padded lanes sliced off below

    grid = (n_pad // tile,)
    outT = pl.pallas_call(
        _pos_enc_kernel_factory(freq_bands),
        out_shape=jax.ShapeDtypeStruct((d_output, n_pad), out_dtype),
        grid=grid,
        in_specs=[pl.BlockSpec((d_input, tile), lambda i: (0, i))],
        out_specs=pl.BlockSpec((d_output, tile), lambda i: (0, i)),
        compiler_params=pltpu.CompilerParams(
            dimension_semantics=("parallel",)),      # lets v7x shard steps over both TCs
    )(xT)

    # Back to the module's layout: (N, d_output) -> (..., d_output).
    out2d = outT[:, :n].T
    return out2d.reshape(*lead_shape, d_output)


def _reference(x: jax.Array, n_freqs: int, log_space: bool) -> jax.Array:
    """Pure-JAX reference of the PyTorch forward for verification."""
    d_input = x.shape[-1]
    d_output = d_input * (1 + 2 * n_freqs)
    freq_bands = _make_freq_bands(n_freqs, log_space)
    parts = [x]
    for f in freq_bands:
        parts.append(jnp.sin(jnp.float32(f) * x))
        parts.append(jnp.cos(jnp.float32(f) * x))
    embed = jnp.concatenate(parts, axis=-1)
    return embed.reshape(*embed.shape[:-2], d_output)


if __name__ == "__main__":
    key = jax.random.PRNGKey(0)
    d_input = 3
    n_freqs = 4

    # Case 1: small canonical batch, log-spaced frequencies (single tile, padded 16 -> 128).
    batch = 16
    x = jax.random.normal(key, (batch, 1, d_input), dtype=jnp.float32)
    out = positional_encoder(x, n_freqs=n_freqs, log_space=True)
    out = jax.block_until_ready(out)
    ref = _reference(x, n_freqs=n_freqs, log_space=True)
    assert out.shape == (batch, d_input * (1 + 2 * n_freqs)), out.shape
    np.testing.assert_allclose(np.asarray(out), np.asarray(ref), rtol=1e-6, atol=1e-6)

    # Case 2: non-multiple batch + small explicit tile to exercise padding and a >1 grid.
    key2 = jax.random.PRNGKey(0)
    batch2 = 300
    x2 = jax.random.normal(key2, (batch2, 1, d_input), dtype=jnp.float32)
    out2 = positional_encoder(x2, n_freqs=n_freqs, log_space=False, tile_n=128)
    out2 = jax.block_until_ready(out2)
    ref2 = _reference(x2, n_freqs=n_freqs, log_space=False)
    assert out2.shape == (batch2, d_input * (1 + 2 * n_freqs)), out2.shape
    np.testing.assert_allclose(np.asarray(out2), np.asarray(ref2), rtol=1e-6, atol=1e-6)

    print("KERNEL_OK")
</pallas_src>

<mosaic_0001>
module attributes {stable_mosaic.version = 11 : i64} {
  func.func @kernel(%arg0: i32, %arg1: memref<3x128xf32, #tpu.memory_space<vmem>>, %arg2: memref<27x128xf32, #tpu.memory_space<vmem>>) attributes {dimension_semantics = [#tpu.dimension_semantics<parallel>], iteration_bounds = array<i64: 1>, scalar_prefetch = 0 : i64, scratch_operands = 0 : i64, tpu.core_type = #tpu.core_type<tc>, window_params = [{transform_indices = @transform_0, window_bounds = array<i64: 3, 128>}, {transform_indices = @transform_1, window_bounds = array<i64: 27, 128>}]} {
    %c0 = arith.constant 0 : index
    %c0_0 = arith.constant 0 : index
    %0 = vector.load %arg1[%c0, %c0_0] : memref<3x128xf32, #tpu.memory_space<vmem>>, vector<3x128xf32>
    %cst = arith.constant 1.000000e+00 : f32
    %1 = vector.broadcast %cst : f32 to vector<3x128xf32>
    %2 = arith.mulf %1, %0 : vector<3x128xf32>
    %3 = math.sin %2 : vector<3x128xf32>
    %4 = math.cos %2 : vector<3x128xf32>
    %cst_1 = arith.constant 2.000000e+00 : f32
    %5 = vector.broadcast %cst_1 : f32 to vector<3x128xf32>
    %6 = arith.mulf %5, %0 : vector<3x128xf32>
    %7 = math.sin %6 : vector<3x128xf32>
    %8 = math.cos %6 : vector<3x128xf32>
    %cst_2 = arith.constant 4.000000e+00 : f32
    %9 = vector.broadcast %cst_2 : f32 to vector<3x128xf32>
    %10 = arith.mulf %9, %0 : vector<3x128xf32>
    %11 = math.sin %10 : vector<3x128xf32>
    %12 = math.cos %10 : vector<3x128xf32>
    %cst_3 = arith.constant 8.000000e+00 : f32
    %13 = vector.broadcast %cst_3 : f32 to vector<3x128xf32>
    %14 = arith.mulf %13, %0 : vector<3x128xf32>
    %15 = math.sin %14 : vector<3x128xf32>
    %16 = math.cos %14 : vector<3x128xf32>
    %17 = tpu.concatenate %0, %3, %4, %7, %8, %11, %12, %15, %16 in 0 : vector<3x128xf32>, vector<3x128xf32>, vector<3x128xf32>, vector<3x128xf32>, vector<3x128xf32>, vector<3x128xf32>, vector<3x128xf32>, vector<3x128xf32>, vector<3x128xf32> -> vector<27x128xf32>
    %c0_4 = arith.constant 0 : index
    %c0_5 = arith.constant 0 : index
    %18 = vector.load %arg2[%c0_4, %c0_5] : memref<27x128xf32, #tpu.memory_space<vmem>>, vector<27x128xf32>
    tpu.vector_store %arg2[%c0_4, %c0_5], %17 {strides = array<i32>} : memref<27x128xf32, #tpu.memory_space<vmem>>, vector<27x128xf32>,
    return
  }
  func.func @transform_0(%arg0: i32) -> (i32, i32) {
    %c0_i32 = arith.constant 0 : i32
    %c0_i32_0 = arith.constant 0 : i32
    return %c0_i32, %arg0 : i32, i32
  }
  func.func @transform_1(%arg0: i32) -> (i32, i32) {
    %c0_i32 = arith.constant 0 : i32
    %c0_i32_0 = arith.constant 0 : i32
    return %c0_i32, %arg0 : i32, i32
  }
}

</mosaic_0001>

<llo_original>
// kernel: tpu_custom_call.1
$region0: #{tpu_custom_call.1}
  #allocation0 [shape = 'u32[]', space=smem, size = 0x4, offset = 0x4, fixed_abs, tag = 'smem constant byte address 0x4 - core index']
  #allocation1 [shape = 'u32[72,128]{1,0:T(1,128)}', space=vmem, size = 0x9000, scoped, tag = 'internal scratch']
  %s0 = inlined_call_operand.hbm [shape: f32[3,128], index: 0, kind: input, shape index: {}]
  %s1 = inlined_call_operand.hbm [shape: f32[27,128], index: 1, kind: output, shape index: {}]
  %s2 = sld [smem:[#allocation0]]
  $region18: #{tpu_custom_call.1} parent=0
    _
  %s4 = ssub.s32 1, %s2
  %s5 = scalar_select 0, %s4, %s2
  $region1: #{tpu_custom_call.1} parent=0
    #allocation2 [shape = 'u8[2048]{0}', space=vmem, size = 0x800, scoped, tag = 'input window, operand 0, single buffered']
    #allocation3 [shape = 's32[1]{0}', space=sflag, size = 0x4, scoped, tag = 'scoped memory for tpu_custom_call.1']
    #allocation4 [shape = 's32[1]{0}', space=sflag, size = 0x4, scoped, tag = 'scoped memory for tpu_custom_call.1']
    #allocation5 [shape = 'u8[16384]{0}', space=vmem, size = 0x4000, scoped, tag = 'output window, operand 0, single buffered']
    %6 = vsyncpa [#allocation3], 0
    %7 = vsyncpa [#allocation4], 0
    // Predicated region
    $region2: #{tpu_custom_call.1} parent=1 // pred_check
      _
    $region3: #{tpu_custom_call.1} parent=1 // pred_check_branch
      %9 = sbr.rel (0) target = $region5
    $region4: #{tpu_custom_call.1} parent=1 // pred_region
      %11 = vsyncadd [#allocation3], 0
      %s13 = sshll.u32 %s0, 4
      %s14 = int_to_ptr.hbm [resolvable:$true] %s13
      %s15 = sshll.u32 [#allocation2], 4
      %s16 = int_to_ptr.vmem [resolvable:$true] %s15
      %18 = dma.hbm_to_vmem [thread:$0]  %s14, 64, %s16, [#allocation3]
    $region5: #{tpu_custom_call.1} parent=1 // pred_fallthru
      _
    // Predicated region
    $region6: #{tpu_custom_call.1} parent=1 // pred_check
      _
    $region7: #{tpu_custom_call.1} parent=1 // pred_check_branch
      %20 = sbr.rel (0) target = $region9
    $region8: #{tpu_custom_call.1} parent=1 // pred_region
      %22 = dma.done [#allocation3], 64
    $region9: #{tpu_custom_call.1} parent=1 // pred_fallthru
      _
    %v23 = vld [vmem:[#allocation2] sm:$0x7]
    %v24 = vand.u32 2147483647, %v23
    %vm25 = vcmp.le.f32.partialorder %v24, 0.7853982
    %vm26 = vcmp.lt.s32.totalorder %v23, 0
    %v27 = vand.u32 %v23, 2139095040
    %v28 = vshrl.u32 %v27, 23
    %v29 = vsub.s32 %v28, 127
    %v30 = vand.u32 2147483647, %v23
    %v31 = vand.u32 %v30, 8388607
    %v32 = vor.u32 %v31, 8388608
    %v33 = vsub.s32 0, %v32
    %v34 = vadd.s32 %v29, 1
    %vm35 = vcmp.gt.s32.totalorder %v34, 0
    %v36 = vsel %vm35, %v34, 0
    %v37 = vshrl.u32 %v36, 5
    %v38 = vand.u32 %v36, 31
    %v39 = vsub.s32 32, %v38
    %v40 = vshrl.u32 683565275, %v39
    %v41 = vshll.u32 683565275, %v38
    %v42 = vshrl.u32 2475754826, %v39
    %v43 = vor.u32 %v41, %v42
    %v44 = vshll.u32 2475754826, %v38
    %v45 = vshrl.u32 2131351028, %v39
    %v46 = vor.u32 %v44, %v45
    %v47 = vshll.u32 2131351028, %v38
    %v48 = vshrl.u32 2102212464, %v39
    %v49 = vor.u32 %v47, %v48
    %v50 = vshll.u32 2102212464, %v38
    %v51 = vshrl.u32 920167782, %v39
    %v52 = vor.u32 %v50, %v51
    %v53 = vshll.u32 920167782, %v38
    %v54 = vshrl.u32 1326507024, %v39
    %v55 = vor.u32 %v53, %v54
    %vm56 = vcmp.lt.s32.totalorder %v37, 1
    %vm57 = vcmp.lt.s32.totalorder %v37, 2
    %vm58 = vcmp.lt.s32.totalorder %v37, 3
    %vm59 = vcmp.lt.s32.totalorder %v37, 4
    %v60 = vsel %vm56, %v40, %v43
    %v61 = vsel %vm59, %v49, 2102212464
    %v62 = vsel %vm58, %v46, %v61
    %v63 = vsel %vm57, %v60, %v62
    %v64 = vsel %vm56, %v43, %v46
    %v65 = vsel %vm59, %v52, 920167782
    %v66 = vsel %vm58, %v49, %v65
    %v67 = vsel %vm57, %v64, %v66
    %v68 = vsel %vm56, %v46, %v49
    %v69 = vsel %vm59, %v55, 1326507024
    %v70 = vsel %vm58, %v52, %v69
    %v71 = vsel %vm57, %v68, %v70
    %v72 = vshll.u32 %v32, 8
    %v73 = vand.u32 %v72, 65535
    %v74 = vshrl.u32 %v72, 16
    %v75 = vand.u32 %v71, 65535
    %v76 = vshrl.u32 %v71, 16
    %v77 = vmul.u32 %v73, %v75
    %v78 = vmul.u32 %v73, %v76
    %v79 = vmul.u32 %v74, %v75
    %v80 = vmul.u32 %v74, %v76
    %v81 = vshll.u32 %v78, 16
    %v82 = vshrl.u32 %v78, 16
    %v83 = vshll.u32 %v79, 16
    %v84 = vshrl.u32 %v79, 16
    %vm85 = vc.u32 %v77, %v81
    %v86 = vsel %vm85, 1, 0
    %v87 = vadd.s32 %v77, %v81
    %v88 = vadd.s32 %v80, %v86
    %vm89 = vc.u32 %v87, %v83
    %v90 = vsel %vm89, 1, 0
    %v91 = vadd.s32 %v87, %v83
    %v92 = vadd.s32 %v88, %v90
    %v93 = vadd.s32 %v92, %v82
    %v94 = vadd.s32 %v93, %v84
    %v95 = vand.u32 %v72, 65535
    %v96 = vshrl.u32 %v72, 16
    %v97 = vand.u32 %v67, 65535
    %v98 = vshrl.u32 %v67, 16
    %v99 = vmul.u32 %v95, %v97
    %v100 = vmul.u32 %v95, %v98
    %v101 = vmul.u32 %v96, %v97
    %v102 = vmul.u32 %v96, %v98
    %v103 = vshll.u32 %v100, 16
    %v104 = vshrl.u32 %v100, 16
    %v105 = vshll.u32 %v101, 16
    %v106 = vshrl.u32 %v101, 16
    %vm107 = vc.u32 %v99, %v103
    %v108 = vsel %vm107, 1, 0
    %v109 = vadd.s32 %v99, %v103
    %v110 = vadd.s32 %v102, %v108
    %vm111 = vc.u32 %v109, %v105
    %v112 = vsel %vm111, 1, 0
    %v113 = vadd.s32 %v109, %v105
    %v114 = vadd.s32 %v110, %v112
    %v115 = vadd.s32 %v114, %v104
    %v116 = vadd.s32 %v115, %v106
    %v117 = vmul.u32 %v72, %v63
    %v118 = vadd.s32 %v94, %v113
    %vm119 = vc.u32 %v94, %v113
    %v120 = vadd.s32 %v116, 1
    %v121 = vsel %vm119, %v120, %v116
    %v122 = vadd.s32 %v117, %v121
    %v123 = vadd.s32 %v122, 536870912
    %v124 = vshrl.u32 %v123, 30
    %v125 = vshll.u32 %v124, 30
    %v126 = vsub.s32 %v122, %v125
    %vm127 = vcmp.lt.s32.totalorder %v126, 0
    %v128 = vsub.s32 0, %v126
    %v129 = vsel %vm127, %v128, %v126
    %v130 = vclz %v129
    %v131 = vsub.s32 %v130, 2
    %vm132 = vcmp.gt.s32.totalorder 0, %v131
    %v133 = vsel %vm132, 0, %v131
    %v134 = vsub.s32 32, %v133
    %v135 = vshll.u32 %v126, %v133
    %v136 = vshrl.u32 %v118, %v134
    %v137 = vor.u32 %v135, %v136
    %v138 = vsub.s32 4294967266, %v133
    %v139 = vadd.s32 %v138, 127
    %v140 = vshll.u32 %v139, 23
    %v141 = vor.u32 4788187, %v140
    %v142 = vand.u32 2147483647, %v141
    %v144 = vcvt.s32.f32 %v137
    %v145 = vmul.f32 %v144, %v142
    %v146 = vxor.u32 %v145, 2147483648
    %v147 = vsel %vm26, %v146, %v145
    %v148 = vsub.s32 4, %v124
    %v149 = vsel %vm26, %v148, %v124
    %v150 = vsel %vm25, %v23, %v147
    %v151 = vsel %vm25, 0, %v149
    %v152 = vmul.f32 %v150, %v150
    %v153 = vmul.f32 %v152, -0.001358992
    %v154 = vadd.f32 %v153, 0.041655596
    %v155 = vmul.f32 %v152, %v154
    %v156 = vadd.f32 %v155, -0.4999988
    %v157 = vmul.f32 %v152, %v156
    %v158 = vadd.f32 1.0, %v157
    %v159 = vmul.f32 %v150, %v150
    %v160 = vmul.f32 %v159, -0.00019511016
    %v161 = vadd.f32 %v160, 0.008332121
    %v162 = vmul.f32 %v159, %v161
    %v163 = vadd.f32 %v162, -0.16666654
    %v164 = vmul.f32 %v159, %v163
    %v165 = vadd.f32 %v164, 1.0
    %v166 = vmul.f32 %v165, %v150
    %vm167 = vweird.f32 %v23
    %v168 = vadd.s32 %v151, 3
    %v169 = vand.u32 %v168, 3
    %vm170 = vcmp.lt.s32.totalorder %v169, 2
    %vm171 = vcmp.eq.s32.totalorder %v169, 0
    %v172 = vxor.u32 %v166, 2147483648
    %v173 = vsel %vm171, %v158, %v172
    %vm174 = vcmp.eq.s32.totalorder %v169, 2
    %v175 = vxor.u32 %v158, 2147483648
    %v176 = vsel %vm174, %v175, %v166
    %v177 = vsel %vm170, %v173, %v176
    %v178 = vsel %vm167, nan, %v177
    %v179 = vand.u32 2147483647, %v23
    %vm180 = vcmp.le.f32.partialorder %v179, 0.7853982
    %vm181 = vcmp.lt.s32.totalorder %v23, 0
    %v182 = vand.u32 %v23, 2139095040
    %v183 = vshrl.u32 %v182, 23
    %v184 = vsub.s32 %v183, 127
    %v185 = vand.u32 2147483647, %v23
    %v186 = vand.u32 %v185, 8388607
    %v187 = vor.u32 %v186, 8388608
    %v188 = vsub.s32 0, %v187
    %v189 = vadd.s32 %v184, 1
    %vm190 = vcmp.gt.s32.totalorder %v189, 0
    %v191 = vsel %vm190, %v189, 0
    %v192 = vshrl.u32 %v191, 5
    %v193 = vand.u32 %v191, 31
    %v194 = vsub.s32 32, %v193
    %v195 = vshrl.u32 683565275, %v194
    %v196 = vshll.u32 683565275, %v193
    %v197 = vshrl.u32 2475754826, %v194
    %v198 = vor.u32 %v196, %v197
    %v199 = vshll.u32 2475754826, %v193
    %v200 = vshrl.u32 2131351028, %v194
    %v201 = vor.u32 %v199, %v200
    %v202 = vshll.u32 2131351028, %v193
    %v203 = vshrl.u32 2102212464, %v194
    %v204 = vor.u32 %v202, %v203
    %v205 = vshll.u32 2102212464, %v193
    %v206 = vshrl.u32 920167782, %v194
    %v207 = vor.u32 %v205, %v206
    %v208 = vshll.u32 920167782, %v193
    %v209 = vshrl.u32 1326507024, %v194
    %v210 = vor.u32 %v208, %v209
    %vm211 = vcmp.lt.s32.totalorder %v192, 1
    %vm212 = vcmp.lt.s32.totalorder %v192, 2
    %vm213 = vcmp.lt.s32.totalorder %v192, 3
    %vm214 = vcmp.lt.s32.totalorder %v192, 4
    %v215 = vsel %vm211, %v195, %v198
    %v216 = vsel %vm214, %v204, 2102212464
    %v217 = vsel %vm213, %v201, %v216
    %v218 = vsel %vm212, %v215, %v217
    %v219 = vsel %vm211, %v198, %v201
    %v220 = vsel %vm214, %v207, 920167782
    %v221 = vsel %vm213, %v204, %v220
    %v222 = vsel %vm212, %v219, %v221
    %v223 = vsel %vm211, %v201, %v204
    %v224 = vsel %vm214, %v210, 1326507024
    %v225 = vsel %vm213, %v207, %v224
    %v226 = vsel %vm212, %v223, %v225
    %v227 = vshll.u32 %v187, 8
    %v228 = vand.u32 %v227, 65535
    %v229 = vshrl.u32 %v227, 16
    %v230 = vand.u32 %v226, 65535
    %v231 = vshrl.u32 %v226, 16
    %v232 = vmul.u32 %v228, %v230
    %v233 = vmul.u32 %v228, %v231
    %v234 = vmul.u32 %v229, %v230
    %v235 = vmul.u32 %v229, %v231
    %v236 = vshll.u32 %v233, 16
    %v237 = vshrl.u32 %v233, 16
    %v238 = vshll.u32 %v234, 16
    %v239 = vshrl.u32 %v234, 16
    %vm240 = vc.u32 %v232, %v236
    %v241 = vsel %vm240, 1, 0
    %v242 = vadd.s32 %v232, %v236
    %v243 = vadd.s32 %v235, %v241
    %vm244 = vc.u32 %v242, %v238
    %v245 = vsel %vm244, 1, 0
    %v246 = vadd.s32 %v242, %v238
    %v247 = vadd.s32 %v243, %v245
    %v248 = vadd.s32 %v247, %v237
    %v249 = vadd.s32 %v248, %v239
    %v250 = vand.u32 %v227, 65535
    %v251 = vshrl.u32 %v227, 16
    %v252 = vand.u32 %v222, 65535
    %v253 = vshrl.u32 %v222, 16
    %v254 = vmul.u32 %v250, %v252
    %v255 = vmul.u32 %v250, %v253
    %v256 = vmul.u32 %v251, %v252
    %v257 = vmul.u32 %v251, %v253
    %v258 = vshll.u32 %v255, 16
    %v259 = vshrl.u32 %v255, 16
    %v260 = vshll.u32 %v256, 16
    %v261 = vshrl.u32 %v256, 16
    %vm262 = vc.u32 %v254, %v258
    %v263 = vsel %vm262, 1, 0
    %v264 = vadd.s32 %v254, %v258
    %v265 = vadd.s32 %v257, %v263
    %vm266 = vc.u32 %v264, %v260
    %v267 = vsel %vm266, 1, 0
    %v268 = vadd.s32 %v264, %v260
    %v269 = vadd.s32 %v265, %v267
    %v270 = vadd.s32 %v269, %v259
    %v271 = vadd.s32 %v270, %v261
    %v272 = vmul.u32 %v227, %v218
    %v273 = vadd.s32 %v249, %v268
    %vm274 = vc.u32 %v249, %v268
    %v275 = vadd.s32 %v271, 1
    %v276 = vsel %vm274, %v275, %v271
    %v277 = vadd.s32 %v272, %v276
    %v278 = vadd.s32 %v277, 536870912
    %v279 = vshrl.u32 %v278, 30
    %v280 = vshll.u32 %v279, 30
    %v281 = vsub.s32 %v277, %v280
    %vm282 = vcmp.lt.s32.totalorder %v281, 0
    %v283 = vsub.s32 0, %v281
    %v284 = vsel %vm282, %v283, %v281
    %v285 = vclz %v284
    %v286 = vsub.s32 %v285, 2
    %vm287 = vcmp.gt.s32.totalorder 0, %v286
    %v288 = vsel %vm287, 0, %v286
    %v289 = vsub.s32 32, %v288
    %v290 = vshll.u32 %v281, %v288
    %v291 = vshrl.u32 %v273, %v289
    %v292 = vor.u32 %v290, %v291
    %v293 = vsub.s32 4294967266, %v288
    %v294 = vadd.s32 %v293, 127
    %v295 = vshll.u32 %v294, 23
    %v296 = vor.u32 4788187, %v295
    %v297 = vand.u32 2147483647, %v296
    %v299 = vcvt.s32.f32 %v292
    %v300 = vmul.f32 %v299, %v297
    %v301 = vxor.u32 %v300, 2147483648
    %v302 = vsel %vm181, %v301, %v300
    %v303 = vsub.s32 4, %v279
    %v304 = vsel %vm181, %v303, %v279
    %v305 = vsel %vm180, %v23, %v302
    %v306 = vsel %vm180, 0, %v304
    %v307 = vmul.f32 %v305, %v305
    %v308 = vmul.f32 %v307, -0.001358992
    %v309 = vadd.f32 %v308, 0.041655596
    %v310 = vmul.f32 %v307, %v309
    %v311 = vadd.f32 %v310, -0.4999988
    %v312 = vmul.f32 %v307, %v311
    %v313 = vadd.f32 1.0, %v312
    %v314 = vmul.f32 %v305, %v305
    %v315 = vmul.f32 %v314, -0.00019511016
    %v316 = vadd.f32 %v315, 0.008332121
    %v317 = vmul.f32 %v314, %v316
    %v318 = vadd.f32 %v317, -0.16666654
    %v319 = vmul.f32 %v314, %v318
    %v320 = vadd.f32 %v319, 1.0
    %v321 = vmul.f32 %v320, %v305
    %vm322 = vweird.f32 %v23
    %v323 = vand.u32 %v306, 3
    %vm324 = vcmp.lt.s32.totalorder %v323, 2
    %vm325 = vcmp.eq.s32.totalorder %v323, 0
    %v326 = vxor.u32 %v321, 2147483648
    %v327 = vsel %vm325, %v313, %v326
    %vm328 = vcmp.eq.s32.totalorder %v323, 2
    %v329 = vxor.u32 %v313, 2147483648
    %v330 = vsel %vm328, %v329, %v321
    %v331 = vsel %vm324, %v327, %v330
    %v332 = vsel %vm322, nan, %v331
    %v333 = vmul.f32 %v23, 2.0
    %v334 = vand.u32 2147483647, %v333
    %vm335 = vcmp.le.f32.partialorder %v334, 0.7853982
    %vm336 = vcmp.lt.s32.totalorder %v333, 0
    %v337 = vand.u32 %v333, 2139095040
    %v338 = vshrl.u32 %v337, 23
    %v339 = vsub.s32 %v338, 127
    %v340 = vand.u32 2147483647, %v333
    %v341 = vand.u32 %v340, 8388607
    %v342 = vor.u32 %v341, 8388608
    %v343 = vsub.s32 0, %v342
    %v344 = vadd.s32 %v339, 1
    %vm345 = vcmp.gt.s32.totalorder %v344, 0
    %v346 = vsel %vm345, %v344, 0
    %v347 = vshrl.u32 %v346, 5
    %v348 = vand.u32 %v346, 31
    %v349 = vsub.s32 32, %v348
    %v350 = vshrl.u32 683565275, %v349
    %v351 = vshll.u32 683565275, %v348
    %v352 = vshrl.u32 2475754826, %v349
    %v353 = vor.u32 %v351, %v352
    %v354 = vshll.u32 2475754826, %v348
    %v355 = vshrl.u32 2131351028, %v349
    %v356 = vor.u32 %v354, %v355
    %v357 = vshll.u32 2131351028, %v348
    %v358 = vshrl.u32 2102212464, %v349
    %v359 = vor.u32 %v357, %v358
    %v360 = vshll.u32 2102212464, %v348
    %v361 = vshrl.u32 920167782, %v349
    %v362 = vor.u32 %v360, %v361
    %v363 = vshll.u32 920167782, %v348
    %v364 = vshrl.u32 1326507024, %v349
    %v365 = vor.u32 %v363, %v364
    %vm366 = vcmp.lt.s32.totalorder %v347, 1
    %vm367 = vcmp.lt.s32.totalorder %v347, 2
    %vm368 = vcmp.lt.s32.totalorder %v347, 3
    %vm369 = vcmp.lt.s32.totalorder %v347, 4
    %v370 = vsel %vm366, %v350, %v353
    %v371 = vsel %vm369, %v359, 2102212464
    %v372 = vsel %vm368, %v356, %v371
    %v373 = vsel %vm367, %v370, %v372
    %v374 = vsel %vm366, %v353, %v356
    %v375 = vsel %vm369, %v362, 920167782
    %v376 = vsel %vm368, %v359, %v375
    %v377 = vsel %vm367, %v374, %v376
    %v378 = vsel %vm366, %v356, %v359
    %v379 = vsel %vm369, %v365, 1326507024
    %v380 = vsel %vm368, %v362, %v379
    %v381 = vsel %vm367, %v378, %v380
    %v382 = vshll.u32 %v342, 8
    %v383 = vand.u32 %v382, 65535
    %v384 = vshrl.u32 %v382, 16
    %v385 = vand.u32 %v381, 65535
    %v386 = vshrl.u32 %v381, 16
    %v387 = vmul.u32 %v383, %v385
    %v388 = vmul.u32 %v383, %v386
    %v389 = vmul.u32 %v384, %v385
    %v390 = vmul.u32 %v384, %v386
    %v391 = vshll.u32 %v388, 16
    %v392 = vshrl.u32 %v388, 16
    %v393 = vshll.u32 %v389, 16
    %v394 = vshrl.u32 %v389, 16
    %vm395 = vc.u32 %v387, %v391
    %v396 = vsel %vm395, 1, 0
    %v397 = vadd.s32 %v387, %v391
    %v398 = vadd.s32 %v390, %v396
    %vm399 = vc.u32 %v397, %v393
    %v400 = vsel %vm399, 1, 0
    %v401 = vadd.s32 %v397, %v393
    %v402 = vadd.s32 %v398, %v400
    %v403 = vadd.s32 %v402, %v392
    %v404 = vadd.s32 %v403, %v394
    %v405 = vand.u32 %v382, 65535
    %v406 = vshrl.u32 %v382, 16
    %v407 = vand.u32 %v377, 65535
    %v408 = vshrl.u32 %v377, 16
    %v409 = vmul.u32 %v405, %v407
    %v410 = vmul.u32 %v405, %v408
    %v411 = vmul.u32 %v406, %v407
    %v412 = vmul.u32 %v406, %v408
    %v413 = vshll.u32 %v410, 16
    %v414 = vshrl.u32 %v410, 16
    %v415 = vshll.u32 %v411, 16
    %v416 = vshrl.u32 %v411, 16
    %vm417 = vc.u32 %v409, %v413
    %v418 = vsel %vm417, 1, 0
    %v419 = vadd.s32 %v409, %v413
    %v420 = vadd.s32 %v412, %v418
    %vm421 = vc.u32 %v419, %v415
    %v422 = vsel %vm421, 1, 0
    %v423 = vadd.s32 %v419, %v415
    %v424 = vadd.s32 %v420, %v422
    %v425 = vadd.s32 %v424, %v414
    %v426 = vadd.s32 %v425, %v416
    %v427 = vmul.u32 %v382, %v373
    %v428 = vadd.s32 %v404, %v423
    %vm429 = vc.u32 %v404, %v423
    %v430 = vadd.s32 %v426, 1
    %v431 = vsel %vm429, %v430, %v426
    %v432 = vadd.s32 %v427, %v431
    %v433 = vadd.s32 %v432, 536870912
    %v434 = vshrl.u32 %v433, 30
    %v435 = vshll.u32 %v434, 30
    %v436 = vsub.s32 %v432, %v435
    %vm437 = vcmp.lt.s32.totalorder %v436, 0
    %v438 = vsub.s32 0, %v436
    %v439 = vsel %vm437, %v438, %v436
    %v440 = vclz %v439
    %v441 = vsub.s32 %v440, 2
    %vm442 = vcmp.gt.s32.totalorder 0, %v441
    %v443 = vsel %vm442, 0, %v441
    %v444 = vsub.s32 32, %v443
    %v445 = vshll.u32 %v436, %v443
    %v446 = vshrl.u32 %v428, %v444
    %v447 = vor.u32 %v445, %v446
    %v448 = vsub.s32 4294967266, %v443
    %v449 = vadd.s32 %v448, 127
    %v450 = vshll.u32 %v449, 23
    %v451 = vor.u32 4788187, %v450
    %v452 = vand.u32 2147483647, %v451
    %v454 = vcvt.s32.f32 %v447
    %v455 = vmul.f32 %v454, %v452
    %v456 = vxor.u32 %v455, 2147483648
    %v457 = vsel %vm336, %v456, %v455
    %v458 = vsub.s32 4, %v434
    %v459 = vsel %vm336, %v458, %v434
    %v460 = vsel %vm335, %v333, %v457
    %v461 = vsel %vm335, 0, %v459
    %v462 = vmul.f32 %v460, %v460
    %v463 = vmul.f32 %v462, -0.001358992
    %v464 = vadd.f32 %v463, 0.041655596
    %v465 = vmul.f32 %v462, %v464
    %v466 = vadd.f32 %v465, -0.4999988
    %v467 = vmul.f32 %v462, %v466
    %v468 = vadd.f32 1.0, %v467
    %v469 = vmul.f32 %v460, %v460
    %v470 = vmul.f32 %v469, -0.00019511016
    %v471 = vadd.f32 %v470, 0.008332121
    %v472 = vmul.f32 %v469, %v471
    %v473 = vadd.f32 %v472, -0.16666654
    %v474 = vmul.f32 %v469, %v473
    %v475 = vadd.f32 %v474, 1.0
    %v476 = vmul.f32 %v475, %v460
    %vm477 = vweird.f32 %v333
    %v478 = vadd.s32 %v461, 3
    %v479 = vand.u32 %v478, 3
    %vm480 = vcmp.lt.s32.totalorder %v479, 2
    %vm481 = vcmp.eq.s32.totalorder %v479, 0
    %v482 = vxor.u32 %v476, 2147483648
    %v483 = vsel %vm481, %v468, %v482
    %vm484 = vcmp.eq.s32.totalorder %v479, 2
    %v485 = vxor.u32 %v468, 2147483648
    %v486 = vsel %vm484, %v485, %v476
    %v487 = vsel %vm480, %v483, %v486
    %v488 = vsel %vm477, nan, %v487
    %v489 = vand.u32 2147483647, %v333
    %vm490 = vcmp.le.f32.partialorder %v489, 0.7853982
    %vm491 = vcmp.lt.s32.totalorder %v333, 0
    %v492 = vand.u32 %v333, 2139095040
    %v493 = vshrl.u32 %v492, 23
    %v494 = vsub.s32 %v493, 127
    %v495 = vand.u32 2147483647, %v333
    %v496 = vand.u32 %v495, 8388607
    %v497 = vor.u32 %v496, 8388608
    %v498 = vsub.s32 0, %v497
    %v499 = vadd.s32 %v494, 1
    %vm500 = vcmp.gt.s32.totalorder %v499, 0
    %v501 = vsel %vm500, %v499, 0
    %v502 = vshrl.u32 %v501, 5
    %v503 = vand.u32 %v501, 31
    %v504 = vsub.s32 32, %v503
    %v505 = vshrl.u32 683565275, %v504
    %v506 = vshll.u32 683565275, %v503
    %v507 = vshrl.u32 2475754826, %v504
    %v508 = vor.u32 %v506, %v507
    %v509 = vshll.u32 2475754826, %v503
    %v510 = vshrl.u32 2131351028, %v504
    %v511 = vor.u32 %v509, %v510
    %v512 = vshll.u32 2131351028, %v503
    %v513 = vshrl.u32 2102212464, %v504
    %v514 = vor.u32 %v512, %v513
    %v515 = vshll.u32 2102212464, %v503
    %v516 = vshrl.u32 920167782, %v504
    %v517 = vor.u32 %v515, %v516
    %v518 = vshll.u32 920167782, %v503
    %v519 = vshrl.u32 1326507024, %v504
    %v520 = vor.u32 %v518, %v519
    %vm521 = vcmp.lt.s32.totalorder %v502, 1
    %vm522 = vcmp.lt.s32.totalorder %v502, 2
    %vm523 = vcmp.lt.s32.totalorder %v502, 3
    %vm524 = vcmp.lt.s32.totalorder %v502, 4
    %v525 = vsel %vm521, %v505, %v508
    %v526 = vsel %vm524, %v514, 2102212464
    %v527 = vsel %vm523, %v511, %v526
    %v528 = vsel %vm522, %v525, %v527
    %v529 = vsel %vm521, %v508, %v511
    %v530 = vsel %vm524, %v517, 920167782
    %v531 = vsel %vm523, %v514, %v530
    %v532 = vsel %vm522, %v529, %v531
    %v533 = vsel %vm521, %v511, %v514
    %v534 = vsel %vm524, %v520, 1326507024
    %v535 = vsel %vm523, %v517, %v534
    %v536 = vsel %vm522, %v533, %v535
    %v537 = vshll.u32 %v497, 8
    %v538 = vand.u32 %v537, 65535
    %v539 = vshrl.u32 %v537, 16
    %v540 = vand.u32 %v536, 65535
    %v541 = vshrl.u32 %v536, 16
    %v542 = vmul.u32 %v538, %v540
    %v543 = vmul.u32 %v538, %v541
    %v544 = vmul.u32 %v539, %v540
    %v545 = vmul.u32 %v539, %v541
    %v546 = vshll.u32 %v543, 16
    %v547 = vshrl.u32 %v543, 16
    %v548 = vshll.u32 %v544, 16
    %v549 = vshrl.u32 %v544, 16
    %vm550 = vc.u32 %v542, %v546
    %v551 = vsel %vm550, 1, 0
    %v552 = vadd.s32 %v542, %v546
    %v553 = vadd.s32 %v545, %v551
    %vm554 = vc.u32 %v552, %v548
    %v555 = vsel %vm554, 1, 0
    %v556 = vadd.s32 %v552, %v548
    %v557 = vadd.s32 %v553, %v555
    %v558 = vadd.s32 %v557, %v547
    %v559 = vadd.s32 %v558, %v549
    %v560 = vand.u32 %v537, 65535
    %v561 = vshrl.u32 %v537, 16
    %v562 = vand.u32 %v532, 65535
    %v563 = vshrl.u32 %v532, 16
    %v564 = vmul.u32 %v560, %v562
    %v565 = vmul.u32 %v560, %v563
    %v566 = vmul.u32 %v561, %v562
    %v567 = vmul.u32 %v561, %v563
    %v568 = vshll.u32 %v565, 16
    %v569 = vshrl.u32 %v565, 16
    %v570 = vshll.u32 %v566, 16
    %v571 = vshrl.u32 %v566, 16
    %vm572 = vc.u32 %v564, %v568
    %v573 = vsel %vm572, 1, 0
    %v574 = vadd.s32 %v564, %v568
    %v575 = vadd.s32 %v567, %v573
    %vm576 = vc.u32 %v574, %v570
    %v577 = vsel %vm576, 1, 0
    %v578 = vadd.s32 %v574, %v570
    %v579 = vadd.s32 %v575, %v577
    %v580 = vadd.s32 %v579, %v569
    %v581 = vadd.s32 %v580, %v571
    %v582 = vmul.u32 %v537, %v528
    %v583 = vadd.s32 %v559, %v578
    %vm584 = vc.u32 %v559, %v578
    %v585 = vadd.s32 %v581, 1
    %v586 = vsel %vm584, %v585, %v581
    %v587 = vadd.s32 %v582, %v586
    %v588 = vadd.s32 %v587, 536870912
    %v589 = vshrl.u32 %v588, 30
    %v590 = vshll.u32 %v589, 30
    %v591 = vsub.s32 %v587, %v590
    %vm592 = vcmp.lt.s32.totalorder %v591, 0
    %v593 = vsub.s32 0, %v591
    %v594 = vsel %vm592, %v593, %v591
    %v595 = vclz %v594
    %v596 = vsub.s32 %v595, 2
    %vm597 = vcmp.gt.s32.totalorder 0, %v596
    %v598 = vsel %vm597, 0, %v596
    %v599 = vsub.s32 32, %v598
    %v600 = vshll.u32 %v591, %v598
    %v601 = vshrl.u32 %v583, %v599
    %v602 = vor.u32 %v600, %v601
    %v603 = vsub.s32 4294967266, %v598
    %v604 = vadd.s32 %v603, 127
    %v605 = vshll.u32 %v604, 23
    %v606 = vor.u32 4788187, %v605
    %v607 = vand.u32 2147483647, %v606
    %v609 = vcvt.s32.f32 %v602
    %v610 = vmul.f32 %v609, %v607
    %v611 = vxor.u32 %v610, 2147483648
    %v612 = vsel %vm491, %v611, %v610
    %v613 = vsub.s32 4, %v589
    %v614 = vsel %vm491, %v613, %v589
    %v615 = vsel %vm490, %v333, %v612
    %v616 = vsel %vm490, 0, %v614
    %v617 = vmul.f32 %v615, %v615
    %v618 = vmul.f32 %v617, -0.001358992
    %v619 = vadd.f32 %v618, 0.041655596
    %v620 = vmul.f32 %v617, %v619
    %v621 = vadd.f32 %v620, -0.4999988
    %v622 = vmul.f32 %v617, %v621
    %v623 = vadd.f32 1.0, %v622
    %v624 = vmul.f32 %v615, %v615
    %v625 = vmul.f32 %v624, -0.00019511016
    %v626 = vadd.f32 %v625, 0.008332121
    %v627 = vmul.f32 %v624, %v626
    %v628 = vadd.f32 %v627, -0.16666654
    %v629 = vmul.f32 %v624, %v628
    %v630 = vadd.f32 %v629, 1.0
    %v631 = vmul.f32 %v630, %v615
    %vm632 = vweird.f32 %v333
    %v633 = vand.u32 %v616, 3
    %vm634 = vcmp.lt.s32.totalorder %v633, 2
    %vm635 = vcmp.eq.s32.totalorder %v633, 0
    %v636 = vxor.u32 %v631, 2147483648
    %v637 = vsel %vm635, %v623, %v636
    %vm638 = vcmp.eq.s32.totalorder %v633, 2
    %v639 = vxor.u32 %v623, 2147483648
    %v640 = vsel %vm638, %v639, %v631
    %v641 = vsel %vm634, %v637, %v640
    %v642 = vsel %vm632, nan, %v641
    %v643 = vmul.f32 %v23, 4.0
    %v644 = vand.u32 2147483647, %v643
    %vm645 = vcmp.le.f32.partialorder %v644, 0.7853982
    %vm646 = vcmp.lt.s32.totalorder %v643, 0
    %v647 = vand.u32 %v643, 2139095040
    %v648 = vshrl.u32 %v647, 23
    %v649 = vsub.s32 %v648, 127
    %v650 = vand.u32 2147483647, %v643
    %v651 = vand.u32 %v650, 8388607
    %v652 = vor.u32 %v651, 8388608
    %v653 = vsub.s32 0, %v652
    %v654 = vadd.s32 %v649, 1
    %vm655 = vcmp.gt.s32.totalorder %v654, 0
    %v656 = vsel %vm655, %v654, 0
    %v657 = vshrl.u32 %v656, 5
    %v658 = vand.u32 %v656, 31
    %v659 = vsub.s32 32, %v658
    %v660 = vshrl.u32 683565275, %v659
    %v661 = vshll.u32 683565275, %v658
    %v662 = vshrl.u32 2475754826, %v659
    %v663 = vor.u32 %v661, %v662
    %v664 = vshll.u32 2475754826, %v658
    %v665 = vshrl.u32 2131351028, %v659
    %v666 = vor.u32 %v664, %v665
    %v667 = vshll.u32 2131351028, %v658
    %v668 = vshrl.u32 2102212464, %v659
    %v669 = vor.u32 %v667, %v668
    %v670 = vshll.u32 2102212464, %v658
    %v671 = vshrl.u32 920167782, %v659
    %v672 = vor.u32 %v670, %v671
    %v673 = vshll.u32 920167782, %v658
    %v674 = vshrl.u32 1326507024, %v659
    %v675 = vor.u32 %v673, %v674
    %vm676 = vcmp.lt.s32.totalorder %v657, 1
    %vm677 = vcmp.lt.s32.totalorder %v657, 2
    %vm678 = vcmp.lt.s32.totalorder %v657, 3
    %vm679 = vcmp.lt.s32.totalorder %v657, 4
    %v680 = vsel %vm676, %v660, %v663
    %v681 = vsel %vm679, %v669, 2102212464
    %v682 = vsel %vm678, %v666, %v681
    %v683 = vsel %vm677, %v680, %v682
    %v684 = vsel %vm676, %v663, %v666
    %v685 = vsel %vm679, %v672, 920167782
    %v686 = vsel %vm678, %v669, %v685
    %v687 = vsel %vm677, %v684, %v686
    %v688 = vsel %vm676, %v666, %v669
    %v689 = vsel %vm679, %v675, 1326507024
    %v690 = vsel %vm678, %v672, %v689
    %v691 = vsel %vm677, %v688, %v690
    %v692 = vshll.u32 %v652, 8
    %v693 = vand.u32 %v692, 65535
    %v694 = vshrl.u32 %v692, 16
    %v695 = vand.u32 %v691, 65535
    %v696 = vshrl.u32 %v691, 16
    %v697 = vmul.u32 %v693, %v695
    %v698 = vmul.u32 %v693, %v696
    %v699 = vmul.u32 %v694, %v695
    %v700 = vmul.u32 %v694, %v696
    %v701 = vshll.u32 %v698, 16
    %v702 = vshrl.u32 %v698, 16
    %v703 = vshll.u32 %v699, 16
    %v704 = vshrl.u32 %v699, 16
    %vm705 = vc.u32 %v697, %v701
    %v706 = vsel %vm705, 1, 0
    %v707 = vadd.s32 %v697, %v701
    %v708 = vadd.s32 %v700, %v706
    %vm709 = vc.u32 %v707, %v703
    %v710 = vsel %vm709, 1, 0
    %v711 = vadd.s32 %v707, %v703
    %v712 = vadd.s32 %v708, %v710
    %v713 = vadd.s32 %v712, %v702
    %v714 = vadd.s32 %v713, %v704
    %v715 = vand.u32 %v692, 65535
    %v716 = vshrl.u32 %v692, 16
    %v717 = vand.u32 %v687, 65535
    %v718 = vshrl.u32 %v687, 16
    %v719 = vmul.u32 %v715, %v717
    %v720 = vmul.u32 %v715, %v718
    %v721 = vmul.u32 %v716, %v717
    %v722 = vmul.u32 %v716, %v718
    %v723 = vshll.u32 %v720, 16
    %v724 = vshrl.u32 %v720, 16
    %v725 = vshll.u32 %v721, 16
    %v726 = vshrl.u32 %v721, 16
    %vm727 = vc.u32 %v719, %v723
    %v728 = vsel %vm727, 1, 0
    %v729 = vadd.s32 %v719, %v723
    %v730 = vadd.s32 %v722, %v728
    %vm731 = vc.u32 %v729, %v725
    %v732 = vsel %vm731, 1, 0
    %v733 = vadd.s32 %v729, %v725
    %v734 = vadd.s32 %v730, %v732
    %v735 = vadd.s32 %v734, %v724
    %v736 = vadd.s32 %v735, %v726
    %v737 = vmul.u32 %v692, %v683
    %v738 = vadd.s32 %v714, %v733
    %vm739 = vc.u32 %v714, %v733
    %v740 = vadd.s32 %v736, 1
    %v741 = vsel %vm739, %v740, %v736
    %v742 = vadd.s32 %v737, %v741
    %v743 = vadd.s32 %v742, 536870912
    %v744 = vshrl.u32 %v743, 30
    %v745 = vshll.u32 %v744, 30
    %v746 = vsub.s32 %v742, %v745
    %vm747 = vcmp.lt.s32.totalorder %v746, 0
    %v748 = vsub.s32 0, %v746
    %v749 = vsel %vm747, %v748, %v746
    %v750 = vclz %v749
    %v751 = vsub.s32 %v750, 2
    %vm752 = vcmp.gt.s32.totalorder 0, %v751
    %v753 = vsel %vm752, 0, %v751
    %v754 = vsub.s32 32, %v753
    %v755 = vshll.u32 %v746, %v753
    %v756 = vshrl.u32 %v738, %v754
    %v757 = vor.u32 %v755, %v756
    %v758 = vsub.s32 4294967266, %v753
    %v759 = vadd.s32 %v758, 127
    %v760 = vshll.u32 %v759, 23
    %v761 = vor.u32 4788187, %v760
    %v762 = vand.u32 2147483647, %v761
    %v764 = vcvt.s32.f32 %v757
    %v765 = vmul.f32 %v764, %v762
    %v766 = vxor.u32 %v765, 2147483648
    %v767 = vsel %vm646, %v766, %v765
    %v768 = vsub.s32 4, %v744
    %v769 = vsel %vm646, %v768, %v744
    %v770 = vsel %vm645, %v643, %v767
    %v771 = vsel %vm645, 0, %v769
    %v772 = vmul.f32 %v770, %v770
    %v773 = vmul.f32 %v772, -0.001358992
    %v774 = vadd.f32 %v773, 0.041655596
    %v775 = vmul.f32 %v772, %v774
    %v776 = vadd.f32 %v775, -0.4999988
    %v777 = vmul.f32 %v772, %v776
    %v778 = vadd.f32 1.0, %v777
    %v779 = vmul.f32 %v770, %v770
    %v780 = vmul.f32 %v779, -0.00019511016
    %v781 = vadd.f32 %v780, 0.008332121
    %v782 = vmul.f32 %v779, %v781
    %v783 = vadd.f32 %v782, -0.16666654
    %v784 = vmul.f32 %v779, %v783
    %v785 = vadd.f32 %v784, 1.0
    %v786 = vmul.f32 %v785, %v770
    %vm787 = vweird.f32 %v643
    %v788 = vadd.s32 %v771, 3
    %v789 = vand.u32 %v788, 3
    %vm790 = vcmp.lt.s32.totalorder %v789, 2
    %vm791 = vcmp.eq.s32.totalorder %v789, 0
    %v792 = vxor.u32 %v786, 2147483648
    %v793 = vsel %vm791, %v778, %v792
    %vm794 = vcmp.eq.s32.totalorder %v789, 2
    %v795 = vxor.u32 %v778, 2147483648
    %v796 = vsel %vm794, %v795, %v786
    %v797 = vsel %vm790, %v793, %v796
    %v798 = vsel %vm787, nan, %v797
    %v799 = vand.u32 2147483647, %v643
    %vm800 = vcmp.le.f32.partialorder %v799, 0.7853982
    %vm801 = vcmp.lt.s32.totalorder %v643, 0
    %v802 = vand.u32 %v643, 2139095040
    %v803 = vshrl.u32 %v802, 23
    %v804 = vsub.s32 %v803, 127
    %v805 = vand.u32 2147483647, %v643
    %v806 = vand.u32 %v805, 8388607
    %v807 = vor.u32 %v806, 8388608
    %v808 = vsub.s32 0, %v807
    %v809 = vadd.s32 %v804, 1
    %vm810 = vcmp.gt.s32.totalorder %v809, 0
    %v811 = vsel %vm810, %v809, 0
    %v812 = vshrl.u32 %v811, 5
    %v813 = vand.u32 %v811, 31
    %v814 = vsub.s32 32, %v813
    %v815 = vshrl.u32 683565275, %v814
    %v816 = vshll.u32 683565275, %v813
    %v817 = vshrl.u32 2475754826, %v814
    %v818 = vor.u32 %v816, %v817
    %v819 = vshll.u32 2475754826, %v813
    %v820 = vshrl.u32 2131351028, %v814
    %v821 = vor.u32 %v819, %v820
    %v822 = vshll.u32 2131351028, %v813
    %v823 = vshrl.u32 2102212464, %v814
    %v824 = vor.u32 %v822, %v823
    %v825 = vshll.u32 2102212464, %v813
    %v826 = vshrl.u32 920167782, %v814
    %v827 = vor.u32 %v825, %v826
    %v828 = vshll.u32 920167782, %v813
    %v829 = vshrl.u32 1326507024, %v814
    %v830 = vor.u32 %v828, %v829
    %vm831 = vcmp.lt.s32.totalorder %v812, 1
    %vm832 = vcmp.lt.s32.totalorder %v812, 2
    %vm833 = vcmp.lt.s32.totalorder %v812, 3
    %vm834 = vcmp.lt.s32.totalorder %v812, 4
    %v835 = vsel %vm831, %v815, %v818
    %v836 = vsel %vm834, %v824, 2102212464
    %v837 = vsel %vm833, %v821, %v836
    %v838 = vsel %vm832, %v835, %v837
    %v839 = vsel %vm831, %v818, %v821
    %v840 = vsel %vm834, %v827, 920167782
    %v841 = vsel %vm833, %v824, %v840
    %v842 = vsel %vm832, %v839, %v841
    %v843 = vsel %vm831, %v821, %v824
    %v844 = vsel %vm834, %v830, 1326507024
    %v845 = vsel %vm833, %v827, %v844
    %v846 = vsel %vm832, %v843, %v845
    %v847 = vshll.u32 %v807, 8
    %v848 = vand.u32 %v847, 65535
    %v849 = vshrl.u32 %v847, 16
    %v850 = vand.u32 %v846, 65535
    %v851 = vshrl.u32 %v846, 16
    %v852 = vmul.u32 %v848, %v850
    %v853 = vmul.u32 %v848, %v851
    %v854 = vmul.u32 %v849, %v850
    %v855 = vmul.u32 %v849, %v851
    %v856 = vshll.u32 %v853, 16
    %v857 = vshrl.u32 %v853, 16
    %v858 = vshll.u32 %v854, 16
    %v859 = vshrl.u32 %v854, 16
    %vm860 = vc.u32 %v852, %v856
    %v861 = vsel %vm860, 1, 0
    %v862 = vadd.s32 %v852, %v856
    %v863 = vadd.s32 %v855, %v861
    %vm864 = vc.u32 %v862, %v858
    %v865 = vsel %vm864, 1, 0
    %v866 = vadd.s32 %v862, %v858
    %v867 = vadd.s32 %v863, %v865
    %v868 = vadd.s32 %v867, %v857
    %v869 = vadd.s32 %v868, %v859
    %v870 = vand.u32 %v847, 65535
    %v871 = vshrl.u32 %v847, 16
    %v872 = vand.u32 %v842, 65535
    %v873 = vshrl.u32 %v842, 16
    %v874 = vmul.u32 %v870, %v872
    %v875 = vmul.u32 %v870, %v873
    %v876 = vmul.u32 %v871, %v872
    %v877 = vmul.u32 %v871, %v873
    %v878 = vshll.u32 %v875, 16
    %v879 = vshrl.u32 %v875, 16
    %v880 = vshll.u32 %v876, 16
    %v881 = vshrl.u32 %v876, 16
    %vm882 = vc.u32 %v874, %v878
    %v883 = vsel %vm882, 1, 0
    %v884 = vadd.s32 %v874, %v878
    %v885 = vadd.s32 %v877, %v883
    %vm886 = vc.u32 %v884, %v880
    %v887 = vsel %vm886, 1, 0
    %v888 = vadd.s32 %v884, %v880
    %v889 = vadd.s32 %v885, %v887
    %v890 = vadd.s32 %v889, %v879
    %v891 = vadd.s32 %v890, %v881
    %v892 = vmul.u32 %v847, %v838
    %v893 = vadd.s32 %v869, %v888
    %vm894 = vc.u32 %v869, %v888
    %v895 = vadd.s32 %v891, 1
    %v896 = vsel %vm894, %v895, %v891
    %v897 = vadd.s32 %v892, %v896
    %v898 = vadd.s32 %v897, 536870912
    %v899 = vshrl.u32 %v898, 30
    %v900 = vshll.u32 %v899, 30
    %v901 = vsub.s32 %v897, %v900
    %vm902 = vcmp.lt.s32.totalorder %v901, 0
    %v903 = vsub.s32 0, %v901
    %v904 = vsel %vm902, %v903, %v901
    %v905 = vclz %v904
    %v906 = vsub.s32 %v905, 2
    %vm907 = vcmp.gt.s32.totalorder 0, %v906
    %v908 = vsel %vm907, 0, %v906
    %v909 = vsub.s32 32, %v908
    %v910 = vshll.u32 %v901, %v908
    %v911 = vshrl.u32 %v893, %v909
    %v912 = vor.u32 %v910, %v911
    %v913 = vsub.s32 4294967266, %v908
    %v914 = vadd.s32 %v913, 127
    %v915 = vshll.u32 %v914, 23
    %v916 = vor.u32 4788187, %v915
    %v917 = vand.u32 2147483647, %v916
    %v919 = vcvt.s32.f32 %v912
    %v920 = vmul.f32 %v919, %v917
    %v921 = vxor.u32 %v920, 2147483648
    %v922 = vsel %vm801, %v921, %v920
    %v923 = vsub.s32 4, %v899
    %v924 = vsel %vm801, %v923, %v899
    %v925 = vsel %vm800, %v643, %v922
    %v926 = vsel %vm800, 0, %v924
    %v927 = vmul.f32 %v925, %v925
    %v928 = vmul.f32 %v927, -0.001358992
    %v929 = vadd.f32 %v928, 0.041655596
    %v930 = vmul.f32 %v927, %v929
    %v931 = vadd.f32 %v930, -0.4999988
    %v932 = vmul.f32 %v927, %v931
    %v933 = vadd.f32 1.0, %v932
    %v934 = vmul.f32 %v925, %v925
    %v935 = vmul.f32 %v934, -0.00019511016
    %v936 = vadd.f32 %v935, 0.008332121
    %v937 = vmul.f32 %v934, %v936
    %v938 = vadd.f32 %v937, -0.16666654
    %v939 = vmul.f32 %v934, %v938
    %v940 = vadd.f32 %v939, 1.0
    %v941 = vmul.f32 %v940, %v925
    %vm942 = vweird.f32 %v643
    %v943 = vand.u32 %v926, 3
    %vm944 = vcmp.lt.s32.totalorder %v943, 2
    %vm945 = vcmp.eq.s32.totalorder %v943, 0
    %v946 = vxor.u32 %v941, 2147483648
    %v947 = vsel %vm945, %v933, %v946
    %vm948 = vcmp.eq.s32.totalorder %v943, 2
    %v949 = vxor.u32 %v933, 2147483648
    %v950 = vsel %vm948, %v949, %v941
    %v951 = vsel %vm944, %v947, %v950
    %v952 = vsel %vm942, nan, %v951
    %v953 = vmul.f32 %v23, 8.0
    %v954 = vand.u32 2147483647, %v953
    %vm955 = vcmp.le.f32.partialorder %v954, 0.7853982
    %vm956 = vcmp.lt.s32.totalorder %v953, 0
    %v957 = vand.u32 %v953, 2139095040
    %v958 = vshrl.u32 %v957, 23
    %v959 = vsub.s32 %v958, 127
    %v960 = vand.u32 2147483647, %v953
    %v961 = vand.u32 %v960, 8388607
    %v962 = vor.u32 %v961, 8388608
    %v963 = vsub.s32 0, %v962
    %v964 = vadd.s32 %v959, 1
    %vm965 = vcmp.gt.s32.totalorder %v964, 0
    %v966 = vsel %vm965, %v964, 0
    %v967 = vshrl.u32 %v966, 5
    %v968 = vand.u32 %v966, 31
    %v969 = vsub.s32 32, %v968
    %v970 = vshrl.u32 683565275, %v969
    %v971 = vshll.u32 683565275, %v968
    %v972 = vshrl.u32 2475754826, %v969
    %v973 = vor.u32 %v971, %v972
    %v974 = vshll.u32 2475754826, %v968
    %v975 = vshrl.u32 2131351028, %v969
    %v976 = vor.u32 %v974, %v975
    %v977 = vshll.u32 2131351028, %v968
    %v978 = vshrl.u32 2102212464, %v969
    %v979 = vor.u32 %v977, %v978
    %v980 = vshll.u32 2102212464, %v968
    %v981 = vshrl.u32 920167782, %v969
    %v982 = vor.u32 %v980, %v981
    %v983 = vshll.u32 920167782, %v968
    %v984 = vshrl.u32 1326507024, %v969
    %v985 = vor.u32 %v983, %v984
    %vm986 = vcmp.lt.s32.totalorder %v967, 1
    %vm987 = vcmp.lt.s32.totalorder %v967, 2
    %vm988 = vcmp.lt.s32.totalorder %v967, 3
    %vm989 = vcmp.lt.s32.totalorder %v967, 4
    %v990 = vsel %vm986, %v970, %v973
    %v991 = vsel %vm989, %v979, 2102212464
    %v992 = vsel %vm988, %v976, %v991
    %v993 = vsel %vm987, %v990, %v992
    %v994 = vsel %vm986, %v973, %v976
    %v995 = vsel %vm989, %v982, 920167782
    %v996 = vsel %vm988, %v979, %v995
    %v997 = vsel %vm987, %v994, %v996
    %v998 = vsel %vm986, %v976, %v979
    %v999 = vsel %vm989, %v985, 1326507024
    %v1000 = vsel %vm988, %v982, %v999
    %v1001 = vsel %vm987, %v998, %v1000
    %v1002 = vshll.u32 %v962, 8
    %v1003 = vand.u32 %v1002, 65535
    %v1004 = vshrl.u32 %v1002, 16
    %v1005 = vand.u32 %v1001, 65535
    %v1006 = vshrl.u32 %v1001, 16
    %v1007 = vmul.u32 %v1003, %v1005
    %v1008 = vmul.u32 %v1003, %v1006
    %v1009 = vmul.u32 %v1004, %v1005
    %v1010 = vmul.u32 %v1004, %v1006
    %v1011 = vshll.u32 %v1008, 16
    %v1012 = vshrl.u32 %v1008, 16
    %v1013 = vshll.u32 %v1009, 16
    %v1014 = vshrl.u32 %v1009, 16
    %vm1015 = vc.u32 %v1007, %v1011
    %v1016 = vsel %vm1015, 1, 0
    %v1017 = vadd.s32 %v1007, %v1011
    %v1018 = vadd.s32 %v1010, %v1016
    %vm1019 = vc.u32 %v1017, %v1013
    %v1020 = vsel %vm1019, 1, 0
    %v1021 = vadd.s32 %v1017, %v1013
    %v1022 = vadd.s32 %v1018, %v1020
    %v1023 = vadd.s32 %v1022, %v1012
    %v1024 = vadd.s32 %v1023, %v1014
    %v1025 = vand.u32 %v1002, 65535
    %v1026 = vshrl.u32 %v1002, 16
    %v1027 = vand.u32 %v997, 65535
    %v1028 = vshrl.u32 %v997, 16
    %v1029 = vmul.u32 %v1025, %v1027
    %v1030 = vmul.u32 %v1025, %v1028
    %v1031 = vmul.u32 %v1026, %v1027
    %v1032 = vmul.u32 %v1026, %v1028
    %v1033 = vshll.u32 %v1030, 16
    %v1034 = vshrl.u32 %v1030, 16
    %v1035 = vshll.u32 %v1031, 16
    %v1036 = vshrl.u32 %v1031, 16
    %vm1037 = vc.u32 %v1029, %v1033
    %v1038 = vsel %vm1037, 1, 0
    %v1039 = vadd.s32 %v1029, %v1033
    %v1040 = vadd.s32 %v1032, %v1038
    %vm1041 = vc.u32 %v1039, %v1035
    %v1042 = vsel %vm1041, 1, 0
    %v1043 = vadd.s32 %v1039, %v1035
    %v1044 = vadd.s32 %v1040, %v1042
    %v1045 = vadd.s32 %v1044, %v1034
    %v1046 = vadd.s32 %v1045, %v1036
    %v1047 = vmul.u32 %v1002, %v993
    %v1048 = vadd.s32 %v1024, %v1043
    %vm1049 = vc.u32 %v1024, %v1043
    %v1050 = vadd.s32 %v1046, 1
    %v1051 = vsel %vm1049, %v1050, %v1046
    %v1052 = vadd.s32 %v1047, %v1051
    %v1053 = vadd.s32 %v1052, 536870912
    %v1054 = vshrl.u32 %v1053, 30
    %v1055 = vshll.u32 %v1054, 30
    %v1056 = vsub.s32 %v1052, %v1055
    %vm1057 = vcmp.lt.s32.totalorder %v1056, 0
    %v1058 = vsub.s32 0, %v1056
    %v1059 = vsel %vm1057, %v1058, %v1056
    %v1060 = vclz %v1059
    %v1061 = vsub.s32 %v1060, 2
    %vm1062 = vcmp.gt.s32.totalorder 0, %v1061
    %v1063 = vsel %vm1062, 0, %v1061
    %v1064 = vsub.s32 32, %v1063
    %v1065 = vshll.u32 %v1056, %v1063
    %v1066 = vshrl.u32 %v1048, %v1064
    %v1067 = vor.u32 %v1065, %v1066
    %v1068 = vsub.s32 4294967266, %v1063
    %v1069 = vadd.s32 %v1068, 127
    %v1070 = vshll.u32 %v1069, 23
    %v1071 = vor.u32 4788187, %v1070
    %v1072 = vand.u32 2147483647, %v1071
    %v1074 = vcvt.s32.f32 %v1067
    %v1075 = vmul.f32 %v1074, %v1072
    %v1076 = vxor.u32 %v1075, 2147483648
    %v1077 = vsel %vm956, %v1076, %v1075
    %v1078 = vsub.s32 4, %v1054
    %v1079 = vsel %vm956, %v1078, %v1054
    %v1080 = vsel %vm955, %v953, %v1077
    %v1081 = vsel %vm955, 0, %v1079
    %v1082 = vmul.f32 %v1080, %v1080
    %v1083 = vmul.f32 %v1082, -0.001358992
    %v1084 = vadd.f32 %v1083, 0.041655596
    %v1085 = vmul.f32 %v1082, %v1084
    %v1086 = vadd.f32 %v1085, -0.4999988
    %v1087 = vmul.f32 %v1082, %v1086
    %v1088 = vadd.f32 1.0, %v1087
    %v1089 = vmul.f32 %v1080, %v1080
    %v1090 = vmul.f32 %v1089, -0.00019511016
    %v1091 = vadd.f32 %v1090, 0.008332121
    %v1092 = vmul.f32 %v1089, %v1091
    %v1093 = vadd.f32 %v1092, -0.16666654
    %v1094 = vmul.f32 %v1089, %v1093
    %v1095 = vadd.f32 %v1094, 1.0
    %v1096 = vmul.f32 %v1095, %v1080
    %vm1097 = vweird.f32 %v953
    %v1098 = vadd.s32 %v1081, 3
    %v1099 = vand.u32 %v1098, 3
    %vm1100 = vcmp.lt.s32.totalorder %v1099, 2
    %vm1101 = vcmp.eq.s32.totalorder %v1099, 0
    %v1102 = vxor.u32 %v1096, 2147483648
    %v1103 = vsel %vm1101, %v1088, %v1102
    %vm1104 = vcmp.eq.s32.totalorder %v1099, 2
    %v1105 = vxor.u32 %v1088, 2147483648
    %v1106 = vsel %vm1104, %v1105, %v1096
    %v1107 = vsel %vm1100, %v1103, %v1106
    %v1108 = vsel %vm1097, nan, %v1107
    %v1109 = vand.u32 2147483647, %v953
    %vm1110 = vcmp.le.f32.partialorder %v1109, 0.7853982
    %vm1111 = vcmp.lt.s32.totalorder %v953, 0
    %v1112 = vand.u32 %v953, 2139095040
    %v1113 = vshrl.u32 %v1112, 23
    %v1114 = vsub.s32 %v1113, 127
    %v1115 = vand.u32 2147483647, %v953
    %v1116 = vand.u32 %v1115, 8388607
    %v1117 = vor.u32 %v1116, 8388608
    %v1118 = vsub.s32 0, %v1117
    %v1119 = vadd.s32 %v1114, 1
    %vm1120 = vcmp.gt.s32.totalorder %v1119, 0
    %v1121 = vsel %vm1120, %v1119, 0
    %v1122 = vshrl.u32 %v1121, 5
    %v1123 = vand.u32 %v1121, 31
    %v1124 = vsub.s32 32, %v1123
    %v1125 = vshrl.u32 683565275, %v1124
    %v1126 = vshll.u32 683565275, %v1123
    %v1127 = vshrl.u32 2475754826, %v1124
    %v1128 = vor.u32 %v1126, %v1127
    %v1129 = vshll.u32 2475754826, %v1123
    %v1130 = vshrl.u32 2131351028, %v1124
    %v1131 = vor.u32 %v1129, %v1130
    %v1132 = vshll.u32 2131351028, %v1123
    %v1133 = vshrl.u32 2102212464, %v1124
    %v1134 = vor.u32 %v1132, %v1133
    %v1135 = vshll.u32 2102212464, %v1123
    %v1136 = vshrl.u32 920167782, %v1124
    %v1137 = vor.u32 %v1135, %v1136
    %v1138 = vshll.u32 920167782, %v1123
    %v1139 = vshrl.u32 1326507024, %v1124
    %v1140 = vor.u32 %v1138, %v1139
    %vm1141 = vcmp.lt.s32.totalorder %v1122, 1
    %vm1142 = vcmp.lt.s32.totalorder %v1122, 2
    %vm1143 = vcmp.lt.s32.totalorder %v1122, 3
    %vm1144 = vcmp.lt.s32.totalorder %v1122, 4
    %v1145 = vsel %vm1141, %v1125, %v1128
    %v1146 = vsel %vm1144, %v1134, 2102212464
    %v1147 = vsel %vm1143, %v1131, %v1146
    %v1148 = vsel %vm1142, %v1145, %v1147
    %v1149 = vsel %vm1141, %v1128, %v1131
    %v1150 = vsel %vm1144, %v1137, 920167782
    %v1151 = vsel %vm1143, %v1134, %v1150
    %v1152 = vsel %vm1142, %v1149, %v1151
    %v1153 = vsel %vm1141, %v1131, %v1134
    %v1154 = vsel %vm1144, %v1140, 1326507024
    %v1155 = vsel %vm1143, %v1137, %v1154
    %v1156 = vsel %vm1142, %v1153, %v1155
    %v1157 = vshll.u32 %v1117, 8
    %v1158 = vand.u32 %v1157, 65535
    %v1159 = vshrl.u32 %v1157, 16
    %v1160 = vand.u32 %v1156, 65535
    %v1161 = vshrl.u32 %v1156, 16
    %v1162 = vmul.u32 %v1158, %v1160
    %v1163 = vmul.u32 %v1158, %v1161
    %v1164 = vmul.u32 %v1159, %v1160
    %v1165 = vmul.u32 %v1159, %v1161
    %v1166 = vshll.u32 %v1163, 16
    %v1167 = vshrl.u32 %v1163, 16
    %v1168 = vshll.u32 %v1164, 16
    %v1169 = vshrl.u32 %v1164, 16
    %vm1170 = vc.u32 %v1162, %v1166
    %v1171 = vsel %vm1170, 1, 0
    %v1172 = vadd.s32 %v1162, %v1166
    %v1173 = vadd.s32 %v1165, %v1171
    %vm1174 = vc.u32 %v1172, %v1168
    %v1175 = vsel %vm1174, 1, 0
    %v1176 = vadd.s32 %v1172, %v1168
    %v1177 = vadd.s32 %v1173, %v1175
    %v1178 = vadd.s32 %v1177, %v1167
    %v1179 = vadd.s32 %v1178, %v1169
    %v1180 = vand.u32 %v1157, 65535
    %v1181 = vshrl.u32 %v1157, 16
    %v1182 = vand.u32 %v1152, 65535
    %v1183 = vshrl.u32 %v1152, 16
    %v1184 = vmul.u32 %v1180, %v1182
    %v1185 = vmul.u32 %v1180, %v1183
    %v1186 = vmul.u32 %v1181, %v1182
    %v1187 = vmul.u32 %v1181, %v1183
    %v1188 = vshll.u32 %v1185, 16
    %v1189 = vshrl.u32 %v1185, 16
    %v1190 = vshll.u32 %v1186, 16
    %v1191 = vshrl.u32 %v1186, 16
    %vm1192 = vc.u32 %v1184, %v1188
    %v1193 = vsel %vm1192, 1, 0
    %v1194 = vadd.s32 %v1184, %v1188
    %v1195 = vadd.s32 %v1187, %v1193
    %vm1196 = vc.u32 %v1194, %v1190
    %v1197 = vsel %vm1196, 1, 0
    %v1198 = vadd.s32 %v1194, %v1190
    %v1199 = vadd.s32 %v1195, %v1197
    %v1200 = vadd.s32 %v1199, %v1189
    %v1201 = vadd.s32 %v1200, %v1191
    %v1202 = vmul.u32 %v1157, %v1148
    %v1203 = vadd.s32 %v1179, %v1198
    %vm1204 = vc.u32 %v1179, %v1198
    %v1205 = vadd.s32 %v1201, 1
    %v1206 = vsel %vm1204, %v1205, %v1201
    %v1207 = vadd.s32 %v1202, %v1206
    %v1208 = vadd.s32 %v1207, 536870912
    %v1209 = vshrl.u32 %v1208, 30
    %v1210 = vshll.u32 %v1209, 30
    %v1211 = vsub.s32 %v1207, %v1210
    %vm1212 = vcmp.lt.s32.totalorder %v1211, 0
    %v1213 = vsub.s32 0, %v1211
    %v1214 = vsel %vm1212, %v1213, %v1211
    %v1215 = vclz %v1214
    %v1216 = vsub.s32 %v1215, 2
    %vm1217 = vcmp.gt.s32.totalorder 0, %v1216
    %v1218 = vsel %vm1217, 0, %v1216
    %v1219 = vsub.s32 32, %v1218
    %v1220 = vshll.u32 %v1211, %v1218
    %v1221 = vshrl.u32 %v1203, %v1219
    %v1222 = vor.u32 %v1220, %v1221
    %v1223 = vsub.s32 4294967266, %v1218
    %v1224 = vadd.s32 %v1223, 127
    %v1225 = vshll.u32 %v1224, 23
    %v1226 = vor.u32 4788187, %v1225
    %v1227 = vand.u32 2147483647, %v1226
    %v1229 = vcvt.s32.f32 %v1222
    %v1230 = vmul.f32 %v1229, %v1227
    %v1231 = vxor.u32 %v1230, 2147483648
    %v1232 = vsel %vm1111, %v1231, %v1230
    %v1233 = vsub.s32 4, %v1209
    %v1234 = vsel %vm1111, %v1233, %v1209
    %v1235 = vsel %vm1110, %v953, %v1232
    %v1236 = vsel %vm1110, 0, %v1234
    %v1237 = vmul.f32 %v1235, %v1235
    %v1238 = vmul.f32 %v1237, -0.001358992
    %v1239 = vadd.f32 %v1238, 0.041655596
    %v1240 = vmul.f32 %v1237, %v1239
    %v1241 = vadd.f32 %v1240, -0.4999988
    %v1242 = vmul.f32 %v1237, %v1241
    %v1243 = vadd.f32 1.0, %v1242
    %v1244 = vmul.f32 %v1235, %v1235
    %v1245 = vmul.f32 %v1244, -0.00019511016
    %v1246 = vadd.f32 %v1245, 0.008332121
    %v1247 = vmul.f32 %v1244, %v1246
    %v1248 = vadd.f32 %v1247, -0.16666654
    %v1249 = vmul.f32 %v1244, %v1248
    %v1250 = vadd.f32 %v1249, 1.0
    %v1251 = vmul.f32 %v1250, %v1235
    %vm1252 = vweird.f32 %v953
    %v1253 = vand.u32 %v1236, 3
    %vm1254 = vcmp.lt.s32.totalorder %v1253, 2
    %vm1255 = vcmp.eq.s32.totalorder %v1253, 0
    %v1256 = vxor.u32 %v1251, 2147483648
    %v1257 = vsel %vm1255, %v1243, %v1256
    %vm1258 = vcmp.eq.s32.totalorder %v1253, 2
    %v1259 = vxor.u32 %v1243, 2147483648
    %v1260 = vsel %vm1258, %v1259, %v1251
    %v1261 = vsel %vm1254, %v1257, %v1260
    %v1262 = vsel %vm1252, nan, %v1261
    %v1264 = vrot.slane %v178, 5
    %v1267 = vrot.slane %v332, 2
    %v1270 = vrot.slane %v488, 7
    %v1273 = vrot.slane %v642, 4
    %v1276 = vrot.slane %v798, 1
    %v1279 = vrot.slane %v952, 6
    %v1282 = vrot.slane %v1108, 3
    %vm1284 = vcmask 1042432
    %v1285 = vsel %vm1284, %v23, %v1264
    %vm1286 = vcmask 1045504
    %v1287 = vsel %vm1286, %v1285, %v1267
    %vm1288 = vcmask 1040384
    %v1289 = vsel %vm1288, %v1267, %v1270
    %vm1290 = vcmask 1043456
    %v1291 = vsel %vm1290, %v1289, %v1273
    %vm1292 = vcmask 1046528
    %v1293 = vsel %vm1292, %v1291, %v1276
    %vm1294 = vcmask 1041408
    %v1295 = vsel %vm1294, %v1276, %v1279
    %vm1296 = vcmask 1044480
    %v1297 = vsel %vm1296, %v1295, %v1282
    %1298 = vst [vmem:[#allocation5] sm:$0xff] %v1287
    %1299 = vst [vmem:[#allocation5 + $0x8] sm:$0xff] %v1293
    %1300 = vst [vmem:[#allocation5 + $0x10] sm:$0xff] %v1297
    %1301 = vst [vmem:[#allocation5 + $0x18] sm:$0x7] %v1262
    // Predicated region
    $region10: #{tpu_custom_call.1} parent=1 // pred_check
      _
    $region11: #{tpu_custom_call.1} parent=1 // pred_check_branch
      %1303 = sbr.rel (0) target = $region13
    $region12: #{tpu_custom_call.1} parent=1 // pred_region
      %1305 = vsyncadd [#allocation4], 0
      %s1306 = sshll.u32 [#allocation5], 4
      %s1307 = int_to_ptr.vmem [resolvable:$true] %s1306
      %s1308 = sshll.u32 %s1, 4
      %s1309 = int_to_ptr.hbm [resolvable:$true] %s1308
      %1314 = dma.vmem_to_hbm [thread:$0]  %s1307, 512, %s1309, [#allocation4], 128, 128, 8
    $region13: #{tpu_custom_call.1} parent=1 // pred_fallthru
      _
    // Predicated region
    $region14: #{tpu_custom_call.1} parent=1 // pred_check
      _
    $region15: #{tpu_custom_call.1} parent=1 // pred_check_branch
      %1316 = sbr.rel (0) target = $region17
    $region16: #{tpu_custom_call.1} parent=1 // pred_region
      %1318 = dma.done [#allocation4], 512
    $region17: #{tpu_custom_call.1} parent=1 // pred_fallthru
      _
    %1319 = vsyncpa [#allocation3], 1
    %1320 = vsyncpa [#allocation4], 1

</llo_original>
